<compile_context>
chip_gen: v6e
topology: v6e:2x2x1
jax: 0.10.0
libtpu: 0.0.40
codegen_flags: <defaults>
</compile_context>

<pallas_src>
import jax
import jax.numpy as jnp
from jax.experimental import pallas as pl
from jax.experimental.pallas import tpu as pltpu


def _make_loss_kernel(loss_type, n_rows, TM, Gh, col_ranges, needs_row_mask, W):
    """Build kernel computing one masked row/col-sum per entry of `col_ranges`.

    Refs: (pred_tile, gt_tile, out_block, *acc_scratch).  Accumulates
    per-element losses into (TM, W) f32 VMEM accumulators; reduces over rows on
    the last inner grid step and writes per-column partial sums.
    """

    def kernel(p_ref, g_ref, out_ref, *acc_refs):
        c = pl.program_id(0)   # megacore half (parallel)
        i = pl.program_id(1)   # row-tile index within the half (arbitrary)

        @pl.when(i == 0)
        def _init():
            for a in acc_refs:
                a[...] = jnp.zeros_like(a)

        p = p_ref[...].astype(jnp.float32)
        g = g_ref[...].astype(jnp.float32)
        d = p - g

        if loss_type == "l1":
            per = jnp.abs(d)
        elif loss_type == "l2":
            per = d * d
        elif loss_type == "l1_smooth":
            # SmoothL1Loss with beta = 1.0 (PyTorch default).
            ad = jnp.abs(d)
            per = jnp.where(ad < 1.0, 0.5 * d * d, ad - 0.5)
        else:
            raise ValueError(f"unknown loss type {loss_type}")

        if needs_row_mask:
            # Zero contributions from out-of-range rows (ragged last tile and
            # the clamped duplicate block of the second megacore half).
            row0 = (c * Gh + i) * TM
            ridx = row0 + jax.lax.broadcasted_iota(jnp.int32, (TM, 1), 0)
            per = jnp.where(ridx < n_rows, per, 0.0)

        col = None
        for a, (cs, ce) in zip(acc_refs, col_ranges):
            if cs == 0 and ce == W:
                a[...] += per                      # hot path: no column mask
            else:
                if col is None:
                    col = jax.lax.broadcasted_iota(jnp.int32, (1, W), 1)
                cmask = (col >= cs) & (col < ce)
                a[...] += jnp.where(cmask, per, 0.0)

        @pl.when(i == Gh - 1)
        def _finalize():
            # Per-core, per-range partial column-sums; tiny (1, W) vector store.
            for k, a in enumerate(acc_refs):
                out_ref[:, k, :] = jnp.sum(a[...], axis=0, keepdims=True)

    return kernel


def _masked_mean_losses(pred, gt, col_ranges, loss_type):
    """mean(loss(pred[..., cs:ce], gt[..., cs:ce])) for each (cs, ce).

    Returns a float32 array of shape (len(col_ranges),).  Single HBM pass over
    pred/gt regardless of how many column ranges are requested.
    """
    W = pred.shape[-1]
    p = pred.reshape(-1, W)
    g = gt.reshape(-1, W)
    n_rows = p.shape[0]
    n_out = len(col_ranges)

    # Row tile: big (target ~2 MiB / input block), sublane (8) aligned.
    w_lanes = ((W + 127) // 128) * 128
    tm_cap = max(8, ((2 * 1024 * 1024) // (w_lanes * 4)) // 8 * 8)
    if n_rows <= 8:
        TM = n_rows                          # block dim == full dim is allowed
    else:
        TM = min(tm_cap, (n_rows // 8) * 8)

    G = pl.cdiv(n_rows, TM)                  # total row blocks
    Gh = pl.cdiv(G, 2)                       # row blocks per megacore half
    needs_row_mask = (2 * Gh * TM != n_rows)

    kernel = _make_loss_kernel(loss_type, n_rows, TM, Gh, col_ranges,
                               needs_row_mask, W)

    def in_map(c, i):
        # Clamp so the tail of the second half never issues a fully-OOB DMA;
        # the duplicate block it re-reads is zeroed by the row mask.
        return (jnp.minimum(c * Gh + i, G - 1), 0)

    itemsize = jnp.dtype(pred.dtype).itemsize
    cost = pl.CostEstimate(
        flops=int(3 * n_rows * W * n_out),
        transcendentals=0,
        bytes_accessed=int(2 * n_rows * W * itemsize + 2 * n_out * W * 4),
    )

    out = pl.pallas_call(
        kernel,
        out_shape=jax.ShapeDtypeStruct((2, n_out, W), jnp.float32),
        grid=(2, Gh),
        in_specs=[
            pl.BlockSpec((TM, W), in_map),
            pl.BlockSpec((TM, W), in_map),
        ],
        out_specs=pl.BlockSpec((1, n_out, W), lambda c, i: (c, 0, 0)),
        scratch_shapes=[pltpu.VMEM((TM, W), jnp.float32) for _ in col_ranges],
        compiler_params=pltpu.CompilerParams(
            dimension_semantics=("parallel", "arbitrary"),
            vmem_limit_bytes=32 * 1024 * 1024,
        ),
        cost_estimate=cost,
    )(p, g)

    # Tiny final reduce over (core halves, columns) + normalization.
    sums = jnp.sum(out, axis=(0, 2))                     # (n_out,)
    inv = jnp.asarray([1.0 / (n_rows * (ce - cs)) for cs, ce in col_ranges],
                      dtype=jnp.float32)
    return sums * inv


class ReConsLoss:
    """JAX/Pallas port of the PyTorch ReConsLoss module (forward pass only)."""

    def __init__(self, recons_loss: str, nb_joints: int):
        assert recons_loss in ("l1", "l2", "l1_smooth")
        self.loss_type = recons_loss
        self.nb_joints = nb_joints
        self.motion_dim = (nb_joints - 1) * 12 + 4 + 3 + 4

    def forward(self, motion_pred, motion_gt):
        assert self.motion_dim == motion_pred.shape[-1] == motion_gt.shape[-1]
        # Full feature range: no mask at all in the kernel hot path.
        return _masked_mean_losses(
            motion_pred, motion_gt, [(0, self.motion_dim)], self.loss_type
        )[0]

    def forward_vel(self, motion_pred, motion_gt):
        s = 4
        e = (self.nb_joints - 1) * 3 + 4
        # Column range handled with a cheap in-kernel select on the loaded tile
        # (avoids a wrapper-side slice copy / extra HBM pass).
        return _masked_mean_losses(
            motion_pred, motion_gt, [(s, e)], self.loss_type
        )[0]

    def forward_both(self, motion_pred, motion_gt):
        """Fused forward() + forward_vel(): one HBM pass over pred/gt."""
        assert self.motion_dim == motion_pred.shape[-1] == motion_gt.shape[-1]
        s = 4
        e = (self.nb_joints - 1) * 3 + 4
        res = _masked_mean_losses(
            motion_pred, motion_gt, [(0, self.motion_dim), (s, e)],
            self.loss_type,
        )
        return res[0], res[1]

    __call__ = forward


def _reference_loss(pred, gt, start, end, loss_type):
    p = pred[..., start:end].astype(jnp.float32)
    g = gt[..., start:end].astype(jnp.float32)
    d = p - g
    if loss_type == "l1":
        per = jnp.abs(d)
    elif loss_type == "l2":
        per = d * d
    else:
        ad = jnp.abs(d)
        per = jnp.where(ad < 1.0, 0.5 * d * d, ad - 0.5)
    return jnp.mean(per)


if __name__ == "__main__":
    nb_joints = 4
    motion_dim = (nb_joints - 1) * 12 + 4 + 3 + 4  # = 47
    vel_start, vel_end = 4, (nb_joints - 1) * 3 + 4

    key = jax.random.PRNGKey(0)

    # --- Small primary test (batch=2, seq=8) -------------------------------
    batch, seq = 2, 8
    k1, k2 = jax.random.split(key)
    motion_pred = jax.random.normal(k1, (batch, seq, motion_dim), dtype=jnp.float32)
    motion_gt = jax.random.normal(k2, (batch, seq, motion_dim), dtype=jnp.float32)

    loss_mod = ReConsLoss("l2", nb_joints)
    loss = loss_mod.forward(motion_pred, motion_gt)
    loss_vel = loss_mod.forward_vel(motion_pred, motion_gt)
    loss_f, loss_v = loss_mod.forward_both(motion_pred, motion_gt)
    jax.block_until_ready((loss, loss_vel, loss_f, loss_v))

    ref = _reference_loss(motion_pred, motion_gt, 0, motion_dim, "l2")
    ref_vel = _reference_loss(motion_pred, motion_gt, vel_start, vel_end, "l2")
    assert jnp.allclose(loss, ref, rtol=1e-5, atol=1e-6)
    assert jnp.allclose(loss_vel, ref_vel, rtol=1e-5, atol=1e-6)
    assert jnp.allclose(loss_f, ref, rtol=1e-5, atol=1e-6)
    assert jnp.allclose(loss_v, ref_vel, rtol=1e-5, atol=1e-6)

    # Smooth-L1 and L1 paths (exercise the other elementwise branches).
    for lt in ("l1_smooth", "l1"):
        lm = ReConsLoss(lt, nb_joints)
        lv = lm.forward(motion_pred, motion_gt)
        jax.block_until_ready(lv)
        assert jnp.allclose(lv, _reference_loss(motion_pred, motion_gt, 0,
                                                motion_dim, lt),
                            rtol=1e-5, atol=1e-6)

    # --- Multi-tile test (exercises inner accumulation + ragged/clamped tail)
    k3, k4 = jax.random.split(k1)
    mp2 = jax.random.normal(k3, (2, 4201, motion_dim), dtype=jnp.float32)
    mg2 = jax.random.normal(k4, (2, 4201, motion_dim), dtype=jnp.float32)
    loss2_f, loss2_v = loss_mod.forward_both(mp2, mg2)
    jax.block_until_ready((loss2_f, loss2_v))
    assert jnp.allclose(loss2_f, _reference_loss(mp2, mg2, 0, motion_dim, "l2"),
                        rtol=1e-5, atol=1e-6)
    assert jnp.allclose(loss2_v, _reference_loss(mp2, mg2, vel_start, vel_end, "l2"),
                        rtol=1e-5, atol=1e-6)

    print("KERNEL_OK")
</pallas_src>

<mosaic_0001>
module attributes {stable_mosaic.version = 11 : i64} {
  func.func @kernel(%arg0: i32, %arg1: i32, %arg2: memref<16x47xf32, #tpu.memory_space<vmem>>, %arg3: memref<16x47xf32, #tpu.memory_space<vmem>>, %arg4: memref<1x1x47xf32, #tpu.memory_space<vmem>>, %arg5: memref<16x47xf32, #tpu.memory_space<vmem>>) attributes {dimension_semantics = [#tpu.dimension_semantics<parallel>, #tpu.dimension_semantics<arbitrary>], iteration_bounds = array<i64: 2, 1>, scalar_prefetch = 0 : i64, scratch_operands = 1 : i64, tpu.core_type = #tpu.core_type<tc>, window_params = [{transform_indices = @transform_0, window_bounds = array<i64: 16, 47>}, {transform_indices = @transform_1, window_bounds = array<i64: 16, 47>}, {transform_indices = @transform_2, window_bounds = array<i64: 1, 1, 47>}]} {
    %c0_i32 = arith.constant 0 : i32
    %0 = arith.cmpi eq, %arg1, %c0_i32 : i32
    %1 = arith.extui %0 : i1 to i32
    %c0_i32_0 = arith.constant 0 : i32
    %2 = arith.cmpi ne, %1, %c0_i32_0 : i32
    scf.if %2 {
      %cst_11 = arith.constant 0.000000e+00 : f32
      %25 = vector.broadcast %cst_11 : f32 to vector<16x47xf32>
      %c0_12 = arith.constant 0 : index
      %c0_13 = arith.constant 0 : index
      %26 = vector.load %arg5[%c0_12, %c0_13] : memref<16x47xf32, #tpu.memory_space<vmem>>, vector<16x47xf32>
      tpu.vector_store %arg5[%c0_12, %c0_13], %25 {strides = array<i32>} : memref<16x47xf32, #tpu.memory_space<vmem>>, vector<16x47xf32>,
    } else {
    }
    %c0 = arith.constant 0 : index
    %c0_1 = arith.constant 0 : index
    %3 = vector.load %arg2[%c0, %c0_1] : memref<16x47xf32, #tpu.memory_space<vmem>>, vector<16x47xf32>
    %c0_2 = arith.constant 0 : index
    %c0_3 = arith.constant 0 : index
    %4 = vector.load %arg3[%c0_2, %c0_3] : memref<16x47xf32, #tpu.memory_space<vmem>>, vector<16x47xf32>
    %5 = arith.subf %3, %4 : vector<16x47xf32>
    %6 = arith.mulf %5, %5 : vector<16x47xf32>
    %c1_i32 = arith.constant 1 : i32
    %7 = arith.muli %arg0, %c1_i32 : i32
    %8 = arith.addi %7, %arg1 : i32
    %c16_i32 = arith.constant 16 : i32
    %9 = arith.muli %8, %c16_i32 : i32
    %10 = tpu.iota {dimensions = array<i32: 0>} : vector<16x1xi32>
    %11 = vector.broadcast %9 : i32 to vector<16x1xi32>
    %12 = arith.addi %11, %10 : vector<16x1xi32>
    %c16_i32_4 = arith.constant 16 : i32
    %13 = vector.broadcast %c16_i32_4 : i32 to vector<16x1xi32>
    %14 = arith.cmpi slt, %12, %13 : vector<16x1xi32>
    %cst = arith.constant 0.000000e+00 : f32
    %15 = vector.shape_cast %14 : vector<16x1xi1> to vector<16x1xi1>
    %16 = vector.broadcast %15 : vector<16x1xi1> to vector<16x47xi1>
    %17 = vector.broadcast %cst : f32 to vector<16x47xf32>
    %18 = arith.select %16, %6, %17 : vector<16x47xi1>, vector<16x47xf32>
    %c0_5 = arith.constant 0 : index
    %c0_6 = arith.constant 0 : index
    %19 = vector.load %arg5[%c0_5, %c0_6] : memref<16x47xf32, #tpu.memory_space<vmem>>, vector<16x47xf32>
    %20 = arith.addf %19, %18 : vector<16x47xf32>
    %c0_7 = arith.constant 0 : index
    %c0_8 = arith.constant 0 : index
    %21 = vector.load %arg5[%c0_7, %c0_8] : memref<16x47xf32, #tpu.memory_space<vmem>>, vector<16x47xf32>
    tpu.vector_store %arg5[%c0_7, %c0_8], %20 {strides = array<i32>} : memref<16x47xf32, #tpu.memory_space<vmem>>, vector<16x47xf32>,
    %c0_i32_9 = arith.constant 0 : i32
    %22 = arith.cmpi eq, %arg1, %c0_i32_9 : i32
    %23 = arith.extui %22 : i1 to i32
    %c0_i32_10 = arith.constant 0 : i32
    %24 = arith.cmpi ne, %23, %c0_i32_10 : i32
    scf.if %24 {
      %c0_11 = arith.constant 0 : index
      %c0_12 = arith.constant 0 : index
      %25 = vector.load %arg5[%c0_11, %c0_12] : memref<16x47xf32, #tpu.memory_space<vmem>>, vector<16x47xf32>
      %cst_13 = arith.constant dense<0.000000e+00> : vector<47xf32>
      %26 = vector.multi_reduction <add>, %25, %cst_13 [0] : vector<16x47xf32> to vector<47xf32>
      %27 = vector.shape_cast %26 : vector<47xf32> to vector<1x47xf32>
      %c0_14 = arith.constant 0 : index
      %c0_15 = arith.constant 0 : index
      %c0_16 = arith.constant 0 : index
      %28 = vector.load %arg4[%c0_14, %c0_15, %c0_16] : memref<1x1x47xf32, #tpu.memory_space<vmem>>, vector<1x1x47xf32>
      %29 = vector.shape_cast %28 : vector<1x1x47xf32> to vector<1x47xf32>
      %30 = vector.shape_cast %27 : vector<1x47xf32> to vector<1x1x47xf32>
      tpu.vector_store %arg4[%c0_14, %c0_15, %c0_16], %30 {strides = array<i32>} : memref<1x1x47xf32, #tpu.memory_space<vmem>>, vector<1x1x47xf32>,
    } else {
    }
    return
  }
  func.func @transform_0(%arg0: i32, %arg1: i32) -> (i32, i32) {
    %c1_i32 = arith.constant 1 : i32
    %0 = arith.muli %arg0, %c1_i32 : i32
    %1 = arith.addi %0, %arg1 : i32
    %c0_i32 = arith.constant 0 : i32
    %2 = arith.minsi %1, %c0_i32 : i32
    %c0_i32_0 = arith.constant 0 : i32
    %c0_i32_1 = arith.constant 0 : i32
    return %2, %c0_i32_0 : i32, i32
  }
  func.func @transform_1(%arg0: i32, %arg1: i32) -> (i32, i32) {
    %c1_i32 = arith.constant 1 : i32
    %0 = arith.muli %arg0, %c1_i32 : i32
    %1 = arith.addi %0, %arg1 : i32
    %c0_i32 = arith.constant 0 : i32
    %2 = arith.minsi %1, %c0_i32 : i32
    %c0_i32_0 = arith.constant 0 : i32
    %c0_i32_1 = arith.constant 0 : i32
    return %2, %c0_i32_0 : i32, i32
  }
  func.func @transform_2(%arg0: i32, %arg1: i32) -> (i32, i32, i32) {
    %c0_i32 = arith.constant 0 : i32
    %c0_i32_0 = arith.constant 0 : i32
    %c0_i32_1 = arith.constant 0 : i32
    return %arg0, %c0_i32, %c0_i32_0 : i32, i32, i32
  }
}

</mosaic_0001>

<llo_original>
// kernel: tpu_custom_call.1
$region0: #{tpu_custom_call.1}
  #allocation0 [shape = 'u32[]', space=smem, size = 0x4, offset = 0x4, fixed_abs, tag = 'smem constant byte address 0x4 - core index']
  #allocation1 [shape = 'u32[144,128]{1,0:T(1,128)}', space=vmem, size = 0x12000, scoped, tag = 'internal scratch']
  #allocation2 [shape = 'f32[16,47]{1,0:T(8,128)}', space=vmem, size = 0x2000, scoped, tag = 'scratch operand']
  %s0 = inlined_call_operand.hbm [shape: f32[16,47], index: 0, kind: input, shape index: {}]
  %s1 = inlined_call_operand.hbm [shape: f32[16,47], index: 1, kind: input, shape index: {}]
  %s2 = inlined_call_operand.hbm [shape: f32[2,1,47], index: 2, kind: output, shape index: {}]
  %s3 = sld [smem:[#allocation0]]
  $region57: #{tpu_custom_call.1} parent=0
    _
  %s5 = ssub.s32 1, %s3
  %s6 = scalar_select 0, %s5, %s3
  $region1: #{tpu_custom_call.1} parent=0
    #allocation3 [shape = 'u8[16384]{0}', space=vmem, size = 0x4000, scoped, tag = 'input window, operand 0']
    #allocation4 [shape = 's32[2]{0}', space=sflag, size = 0x8, scoped, tag = 'scoped memory for tpu_custom_call.1']
    #allocation5 [shape = 's32[2]{0}', space=sflag, size = 0x8, scoped, tag = 'scoped memory for tpu_custom_call.1']
    #allocation6 [shape = 'u8[16384]{0}', space=vmem, size = 0x4000, scoped, tag = 'input window, operand 1']
    #allocation7 [shape = 's32[2]{0}', space=sflag, size = 0x8, scoped, tag = 'scoped memory for tpu_custom_call.1']
    #allocation8 [shape = 'u8[1024]{0}', space=vmem, size = 0x400, scoped, tag = 'output window, operand 0']
    %7 = vsyncpa [#allocation4], 0
    %s8 = scalar_lea.sflag [#allocation4], 1
    %9 = vsyncpa %s8, 0
    %10 = vsyncpa [#allocation7], 0
    %s11 = scalar_lea.sflag [#allocation7], 1
    %12 = vsyncpa %s11, 0
    %13 = vsyncpa [#allocation5], 0
    %s14 = scalar_lea.sflag [#allocation5], 1
    %15 = vsyncpa %s14, 0
    loop: start=0, step=1, limit=4
    $region2: #{tpu_custom_call.1} parent=1 // loop_pre_header
      _
    $region3: #{tpu_custom_call.1} parent=1 // loop_header
      %s17 = sphi 0, %s21
      %p18 = scmp.ge.s32.totalorder %s17, 4
      %s24 = sphi 0, %s36
      %s25 = sphi 0, %s32
      %s26 = sphi 0, %s24
      %s27 = sphi 0, %s25
      %s28 = sphi 0, %s26
      %s29 = sphi 0, %s27
      %s45 = sphi 0, %s47
      %s48 = sphi 0, %s45
      %s49 = sphi 0, %s48
      %s65 = sphi 0, %s49
      %s77 = sphi 0, %s79
      %s80 = sphi 0, %s77
      %s81 = sphi 0, %s80
      %s97 = sphi 0, %s81
      %s103 = sphi 0, %s105
      %s106 = sphi 0, %s103
      %s107 = sphi 0, %s106
      %s123 = sphi 0, %s107
    $region4: #{tpu_custom_call.1} parent=1 // loop_header_branch
      %20 = sbr.rel (%p18) target = $region8
    $region5: #{tpu_custom_call.1} parent=1 // loop_body
      %s22 = ssub.s32 %s17, 1
      %s23 = ssub.s32 %s17, 2
      %s30 = sadd.s32 1, %s25
      %p31 = scmp.ge.s32.totalorder %s30, 1
      %s32 = scalar_select %p31, 0, %s30
      %s33 = sadd.s32 1, %s24
      %s34 = scalar_select %p31, %s33, %s24
      %p35 = scmp.ge.s32.totalorder %s34, 2
      %s36 = scalar_select %p35, 0, %s34
      %s37 = sadd.s32 %s24, %s25
      %p38 = scmp.lt.s32.totalorder %s37, 0
      %s39 = scalar_select %p38, %s37, 0
      %s40 = sadd.s32 %s36, %s32
      %p41 = scmp.lt.s32.totalorder %s40, 0
      %s42 = scalar_select %p41, %s40, 0
      %s43 = ssub.s32 %s39, %s42
      %p44 = scmp.eq.s32.totalorder %s43, 0
      %s46 = sadd.s32 %s45, 1
      %s47 = scalar_select %p44, %s45, %s46
      %p50 = pneg %p44
      %p51 = scmp.eq.s32.totalorder %s17, 1
      %p52 = por %p50, %p51
      %p53 = scmp.ne.s32.totalorder %s45, %s48
      %p54 = scmp.eq.s32.totalorder %s17, 0
      %p55 = por %p53, %p54
      %p56 = scmp.ne.s32.totalorder %s45, %s48
      %p57 = scmp.eq.s32.totalorder %s22, 1
      %p58 = por %p56, %p57
      %p59 = scmp.ne.s32.totalorder %s48, %s49
      %p60 = scmp.eq.s32.totalorder %s22, 0
      %p61 = por %p59, %p60
      %p62 = scmp.ne.s32.totalorder %s48, %s49
      %p63 = scmp.eq.s32.totalorder %s23, 1
      %p64 = por %p62, %p63
      %p66 = scmp.ne.s32.totalorder %s49, %s65
      %p67 = scmp.eq.s32.totalorder %s23, 0
      %p68 = por %p66, %p67
      %s69 = sadd.s32 %s24, %s25
      %p70 = scmp.lt.s32.totalorder %s69, 0
      %s71 = scalar_select %p70, %s69, 0
      %s72 = sadd.s32 %s36, %s32
      %p73 = scmp.lt.s32.totalorder %s72, 0
      %s74 = scalar_select %p73, %s72, 0
      %s75 = ssub.s32 %s71, %s74
      %p76 = scmp.eq.s32.totalorder %s75, 0
      %s78 = sadd.s32 %s77, 1
      %s79 = scalar_select %p76, %s77, %s78
      %p82 = pneg %p76
      %p83 = scmp.eq.s32.totalorder %s17, 1
      %p84 = por %p82, %p83
      %p85 = scmp.ne.s32.totalorder %s77, %s80
      %p86 = scmp.eq.s32.totalorder %s17, 0
      %p87 = por %p85, %p86
      %p88 = scmp.ne.s32.totalorder %s77, %s80
      %p89 = scmp.eq.s32.totalorder %s22, 1
      %p90 = por %p88, %p89
      %p91 = scmp.ne.s32.totalorder %s80, %s81
      %p92 = scmp.eq.s32.totalorder %s22, 0
      %p93 = por %p91, %p92
      %p94 = scmp.ne.s32.totalorder %s80, %s81
      %p95 = scmp.eq.s32.totalorder %s23, 1
      %p96 = por %p94, %p95
      %p98 = scmp.ne.s32.totalorder %s81, %s97
      %p99 = scmp.eq.s32.totalorder %s23, 0
      %p100 = por %p98, %p99
      %s101 = ssub.s32 %s24, %s36
      %p102 = scmp.eq.s32.totalorder %s101, 0
      %s104 = sadd.s32 %s103, 1
      %s105 = scalar_select %p102, %s103, %s104
      %p108 = pneg %p102
      %p109 = scmp.eq.s32.totalorder %s17, 1
      %p110 = por %p108, %p109
      %p111 = scmp.ne.s32.totalorder %s103, %s106
      %p112 = scmp.eq.s32.totalorder %s17, 0
      %p113 = por %p111, %p112
      %p114 = scmp.ne.s32.totalorder %s103, %s106
      %p115 = scmp.eq.s32.totalorder %s22, 1
      %p116 = por %p114, %p115
      %p117 = scmp.ne.s32.totalorder %s106, %s107
      %p118 = scmp.eq.s32.totalorder %s22, 0
      %p119 = por %p117, %p118
      %p120 = scmp.ne.s32.totalorder %s106, %s107
      %p121 = scmp.eq.s32.totalorder %s23, 1
      %p122 = por %p120, %p121
      %p124 = scmp.ne.s32.totalorder %s107, %s123
      %p125 = scmp.eq.s32.totalorder %s23, 0
      %p126 = por %p124, %p125
      %p127 = scmp.le.s32.totalorder 1, %s17
      %p128 = scmp.lt.s32.totalorder %s17, 3
      %p129 = pnand %p127, %p128
      %p130 = pneg %p129
      // Predicated region
      $region9: #{tpu_custom_call.1} parent=5 // pred_check
        _
      $region10: #{tpu_custom_call.1} parent=5 // pred_check_branch
        %132 = sbr.rel (%p129) target = $region12
      $region11: #{tpu_custom_call.1} parent=5 // pred_region
        %s133 = ssub.s32 %s17, 1
      $region12: #{tpu_custom_call.1} parent=5 // pred_fallthru
        _
      %p134 = scmp.lt.s32.totalorder %s17, 2
      // Predicated region
      $region13: #{tpu_custom_call.1} parent=5 // pred_check
        %p135 = pneg %p134
      $region14: #{tpu_custom_call.1} parent=5 // pred_check_branch
        %137 = sbr.rel (%p135) target = $region16
      $region15: #{tpu_custom_call.1} parent=5 // pred_region
        // Predicated region
        $region17: #{tpu_custom_call.1} parent=15 // pred_check
          %p138 = pneg %p55
        $region18: #{tpu_custom_call.1} parent=15 // pred_check_branch
          %140 = sbr.rel (%p138) target = $region20
        $region19: #{tpu_custom_call.1} parent=15 // pred_region
          %s141 = sand.u32 %s45, 1
          %s142 = scalar_lea.sflag [#allocation4], %s141
          %s143 = sand.u32 %s45, 1
          %s144 = smul.addr %s143, 16
          %s145 = scalar_lea.vmem [#allocation3], %s144
          %s146 = sadd.s32 %s24, %s25
          %p147 = scmp.lt.s32.totalorder %s146, 0
          %s148 = scalar_select %p147, %s146, 0
          %s149 = smul.u32 2, %s148
          %s151 = ssub.s32 256, 256
          %152 = vsyncadd %s142, %s151
          %s153 = smul.addr %s149, 128
          %s154 = scalar_lea.hbm %s0, %s153
          %s155 = sshll.u32 %s145, 4
          %s156 = int_to_ptr.vmem [resolvable:$true] %s155
          %161 = dma.hbm_to_vmem [thread:$0]  %s154, 256, %s156, %s142, 128, 128, 8
        $region20: #{tpu_custom_call.1} parent=15 // pred_fallthru
          _
        // Predicated region
        $region21: #{tpu_custom_call.1} parent=15 // pred_check
          %p162 = pneg %p87
        $region22: #{tpu_custom_call.1} parent=15 // pred_check_branch
          %164 = sbr.rel (%p162) target = $region24
        $region23: #{tpu_custom_call.1} parent=15 // pred_region
          %s165 = sand.u32 %s77, 1
          %s166 = scalar_lea.sflag [#allocation7], %s165
          %s167 = sand.u32 %s77, 1
          %s168 = smul.addr %s167, 16
          %s169 = scalar_lea.vmem [#allocation6], %s168
          %s170 = sadd.s32 %s24, %s25
          %p171 = scmp.lt.s32.totalorder %s170, 0
          %s172 = scalar_select %p171, %s170, 0
          %s173 = smul.u32 2, %s172
          %s175 = ssub.s32 256, 256
          %176 = vsyncadd %s166, %s175
          %s177 = smul.addr %s173, 128
          %s178 = scalar_lea.hbm %s1, %s177
          %s179 = sshll.u32 %s169, 4
          %s180 = int_to_ptr.vmem [resolvable:$true] %s179
          %185 = dma.hbm_to_vmem [thread:$0]  %s178, 256, %s180, %s166, 128, 128, 8
        $region24: #{tpu_custom_call.1} parent=15 // pred_fallthru
          _
      $region16: #{tpu_custom_call.1} parent=5 // pred_fallthru
        _
      %p186 = scmp.le.s32.totalorder 1, %s17
      %p187 = scmp.lt.s32.totalorder %s17, 3
      %p188 = pnand %p186, %p187
      %p189 = pneg %p188
      // Predicated region
      $region25: #{tpu_custom_call.1} parent=5 // pred_check
        _
      $region26: #{tpu_custom_call.1} parent=5 // pred_check_branch
        %191 = sbr.rel (%p188) target = $region28
      $region27: #{tpu_custom_call.1} parent=5 // pred_region
        %s192 = ssub.s32 %s17, 1
        %s193 = sand.u32 %s48, 1
        %s194 = scalar_lea.sflag [#allocation4], %s193
        %s195 = sand.u32 %s48, 1
        %s196 = smul.addr %s195, 16
        %s197 = scalar_lea.vmem [#allocation3], %s196
        // Predicated region
        $region29: #{tpu_custom_call.1} parent=27 // pred_check
          %p198 = pneg %p61
        $region30: #{tpu_custom_call.1} parent=27 // pred_check_branch
          %200 = sbr.rel (%p198) target = $region32
        $region31: #{tpu_custom_call.1} parent=27 // pred_region
          %201 = dma.done %s194, 256
        $region32: #{tpu_custom_call.1} parent=27 // pred_fallthru
          _
        %s202 = sand.u32 %s80, 1
        %s203 = scalar_lea.sflag [#allocation7], %s202
        %s204 = sand.u32 %s80, 1
        %s205 = smul.addr %s204, 16
        %s206 = scalar_lea.vmem [#allocation6], %s205
        // Predicated region
        $region33: #{tpu_custom_call.1} parent=27 // pred_check
          %p207 = pneg %p93
        $region34: #{tpu_custom_call.1} parent=27 // pred_check_branch
          %209 = sbr.rel (%p207) target = $region36
        $region35: #{tpu_custom_call.1} parent=27 // pred_region
          %210 = dma.done %s203, 256
        $region36: #{tpu_custom_call.1} parent=27 // pred_fallthru
          _
        %s211 = sand.u32 %s48, 1
        %s212 = scalar_lea.sflag [#allocation4], %s211
        %s213 = sand.u32 %s48, 1
        %s214 = smul.addr %s213, 16
        %s215 = scalar_lea.vmem [#allocation3], %s214
        %p216 = pneg %p61
        %p217 = pneg %p58
        %s218 = sand.u32 %s80, 1
        %s219 = scalar_lea.sflag [#allocation7], %s218
        %s220 = sand.u32 %s80, 1
        %s221 = smul.addr %s220, 16
        %s222 = scalar_lea.vmem [#allocation6], %s221
        %p223 = pneg %p93
        %p224 = pneg %p90
        %p225 = pneg %p119
        %p226 = pneg %p116
        %s227 = sand.u32 %s106, 1
        %s228 = scalar_lea.sflag [#allocation5], %s227
        %s229 = sand.u32 %s106, 1
        %s230 = scalar_lea.vmem [#allocation8], %s229
        %s231 = sadd.s32 %s26, %s27
        %p232 = scmp.lt.s32.totalorder %s231, 0
        %s233 = scalar_select %p232, %s231, 0
        %s234 = smul.u32 2, %s233
        %s235 = sadd.s32 %s26, %s27
        %p236 = scmp.lt.s32.totalorder %s235, 0
        %s237 = scalar_select %p236, %s235, 0
        %s238 = smul.u32 2, %s237
        %p239 = scmp.eq.s32.totalorder %s27, 0
        // Predicated region
        $region37: #{tpu_custom_call.1} parent=27 // pred_check
          %p240 = pneg %p239
        $region38: #{tpu_custom_call.1} parent=27 // pred_check_branch
          %242 = sbr.rel (%p240) target = $region40
        $region39: #{tpu_custom_call.1} parent=27 // pred_region
          %vm243 = vcmask 384000
          %244 = vst.msk [vmem:[#allocation2] sm:$0xff] %vm243, 0.0
          %245 = vst.msk [vmem:[#allocation2 + $0x8] sm:$0xff] %vm243, 0.0
        $region40: #{tpu_custom_call.1} parent=27 // pred_fallthru
          _
        %v246 = vld [vmem:[%s197] sm:$0xff]
        %v247 = vld [vmem:[%s197 + $0x8] sm:$0xff]
        %v248 = vld [vmem:[%s206] sm:$0xff]
        %v249 = vld [vmem:[%s206 + $0x8] sm:$0xff]
        %v250 = vsub.f32 %v246, %v248
        %v251 = vsub.f32 %v247, %v249
        %v252 = vmul.f32 %v250, %v250
        %v253 = vmul.f32 %v251, %v251
        %s254 = sadd.s32 %s26, %s27
        %s255 = smul.u32 %s254, 16
        %v256 = vlaneseq
        %v257 = vshrl.u32 %v256, 7
        %v258 = vadd.s32 %v257, 8
        %v259 = vstv %s255
        %v260 = vadd.s32 %v259, %v257
        %v261 = vadd.s32 %v259, %v258
        %vm262 = vcmp.lt.s32.totalorder %v260, 16
        %vm263 = vcmp.lt.s32.totalorder %v261, 16
        %v264 = vsel %vm262, 1, 0
        %v265 = vsel %vm263, 1, 0
        %vm266 = vcmp.eq.s32.totalorder %v264, 1
        %vm267 = vcmp.eq.s32.totalorder %v265, 1
        %v268 = vsel %vm266, %v252, 0.0
        %v269 = vsel %vm267, %v253, 0.0
        %v270 = vld [vmem:[#allocation2] sm:$0xff]
        %v271 = vld [vmem:[#allocation2 + $0x8] sm:$0xff]
        %v272 = vadd.f32 %v270, %v268
        %v273 = vadd.f32 %v271, %v269
        %vm274 = vcmask 384000
        %275 = vst.msk [vmem:[#allocation2] sm:$0xff] %vm274, %v272
        %276 = vst.msk [vmem:[#allocation2 + $0x8] sm:$0xff] %vm274, %v273
        // Predicated region
        $region41: #{tpu_custom_call.1} parent=27 // pred_check
          %p277 = pneg %p239
        $region42: #{tpu_custom_call.1} parent=27 // pred_check_branch
          %279 = sbr.rel (%p277) target = $region44
        $region43: #{tpu_custom_call.1} parent=27 // pred_region
          %v280 = vld [vmem:[#allocation2] sm:$0xff]
          %v281 = vld [vmem:[#allocation2 + $0x8] sm:$0xff]
          %v282 = vsel %vm274, %v280, 0.0
          %v283 = vsel %vm274, %v281, 0.0
          %v284 = vadd.f32 %v282, %v283
          %v285 = vrot.slane %v284, 4
          %v286 = vadd.f32 %v284, %v285
          %v287 = vrot.slane %v286, 2
          %v288 = vadd.f32 %v286, %v287
          %v289 = vrot.slane %v288, 1
          %v290 = vadd.f32 %v288, %v289
          %vm291 = vcmask 376832
          %292 = vst.msk [vmem:[%s230] sm:$0x1] %vm291, %v290
        $region44: #{tpu_custom_call.1} parent=27 // pred_fallthru
          _
        %s293 = sand.u32 %s106, 1
        %s294 = scalar_lea.sflag [#allocation5], %s293
        %s295 = sand.u32 %s106, 1
        %s296 = scalar_lea.vmem [#allocation8], %s295
        // Predicated region
        $region45: #{tpu_custom_call.1} parent=27 // pred_check
          %p297 = pneg %p116
        $region46: #{tpu_custom_call.1} parent=27 // pred_check_branch
          %299 = sbr.rel (%p297) target = $region48
        $region47: #{tpu_custom_call.1} parent=27 // pred_region
          %s301 = ssub.s32 16, 16
          %302 = vsyncadd %s294, %s301
          %s303 = smul.addr %s26, 16
          %s304 = scalar_lea.hbm %s2, %s303
          %s306 = sshll.u32 %s296, 4
          %s307 = int_to_ptr.vmem [resolvable:$true] %s306
          %309 = dma.vmem_to_hbm [thread:$0]  %s307, 16, %s304, %s294
        $region48: #{tpu_custom_call.1} parent=27 // pred_fallthru
          _
      $region28: #{tpu_custom_call.1} parent=5 // pred_fallthru
        _
      %p310 = scmp.le.s32.totalorder 2, %s17
      // Predicated region
      $region49: #{tpu_custom_call.1} parent=5 // pred_check
        %p311 = pneg %p310
      $region50: #{tpu_custom_call.1} parent=5 // pred_check_branch
        %313 = sbr.rel (%p311) target = $region52
      $region51: #{tpu_custom_call.1} parent=5 // pred_region
        %s314 = ssub.s32 %s17, 2
        // Predicated region
        $region53: #{tpu_custom_call.1} parent=51 // pred_check
          %p315 = pneg %p122
        $region54: #{tpu_custom_call.1} parent=51 // pred_check_branch
          %317 = sbr.rel (%p315) target = $region56
        $region55: #{tpu_custom_call.1} parent=51 // pred_region
          %s318 = sand.u32 %s107, 1
          %s319 = scalar_lea.sflag [#allocation5], %s318
          %s320 = sand.u32 %s107, 1
          %s321 = scalar_lea.vmem [#allocation8], %s320
          %322 = dma.done %s319, 16
        $region56: #{tpu_custom_call.1} parent=51 // pred_fallthru
          _
      $region52: #{tpu_custom_call.1} parent=5 // pred_fallthru
        _
    $region6: #{tpu_custom_call.1} parent=1 // loop_footer
      %s21 = sadd.s32 1, %s17
    $region7: #{tpu_custom_call.1} parent=1 // loop_footer_branch
      %16 = sbr.rel target = $region3
    $region8: #{tpu_custom_call.1} parent=1 // loop_exit
      _
    %323 = vsyncpa [#allocation4], 1
    %s324 = scalar_lea.sflag [#allocation4], 1
    %325 = vsyncpa %s324, 1
    %326 = vsyncpa [#allocation7], 1
    %s327 = scalar_lea.sflag [#allocation7], 1
    %328 = vsyncpa %s327, 1
    %329 = vsyncpa [#allocation5], 1
    %s330 = scalar_lea.sflag [#allocation5], 1
    %331 = vsyncpa %s330, 1

</llo_original>
